<compile_context>
chip_gen: v5e
topology: v5e:2x2
jax: 0.10.0
libtpu: 0.0.40
codegen_flags: <defaults>
</compile_context>

<pallas_src>
import jax
import jax.numpy as jnp
from jax.experimental import pallas as pl
from jax.experimental.pallas import tpu as pltpu

_LANES = 128
_SUBLANE_MULTIPLE = 32      # covers sublane pack factor of f32/bf16/int8/fp8
_MIB = 1024 * 1024


def _spike_kernel(thr_ref, x_ref, o_ref):
    # Compare in f32 so narrow-dtype inputs never round the threshold.
    thr = thr_ref[0]                                   # f32 scalar in SMEM
    v = x_ref[...].astype(jnp.float32) - thr
    # NOTE: strict ">" emits 0 at x == threshold (canonical SNN Heaviside
    # spike); flip to ">=" if the reference spike_fn breaks ties the other way.
    o_ref[...] = (v > 0).astype(o_ref.dtype)


def _chip_kind():
    try:
        return jax.devices()[0].device_kind.lower()
    except Exception:
        return ""


def _per_buffer_bytes(kind):
    if "v6" in kind:
        return 4 * _MIB   # 16 MiB pipelined, under v6e's 32 MiB scoped default
    if "v7" in kind or "tpu7" in kind:
        return 8 * _MIB   # 32 MiB pipelined; explicit vmem_limit set below
    # v5e / v5p / older / unknown: 8 MiB pipelined, safely under v5e's
    # 16 MiB scoped-VMEM default.
    return 2 * _MIB


def _spike_pallas(x2d, thr_arr, donate):
    rows, lanes = x2d.shape
    dtype = x2d.dtype
    itemsize = jnp.dtype(dtype).itemsize

    kind = _chip_kind()
    is_v7x = ("v7" in kind) or ("tpu7" in kind)

    # Dtype-aware fat blocks: constant per-buffer VMEM footprint, more rows for
    # narrower dtypes, multiple of 32 rows so any dtype's sublane packing works.
    block_rows = max(_SUBLANE_MULTIPLE,
                     _per_buffer_bytes(kind) // (lanes * itemsize))
    block_rows -= block_rows % _SUBLANE_MULTIPLE
    if block_rows >= rows:
        block_rows = rows                 # block == full array dims: always legal
    num_blocks = pl.cdiv(rows, block_rows)

    n_main = rows * lanes
    cost = pl.CostEstimate(
        flops=2 * n_main, transcendentals=0, bytes_accessed=2 * n_main * itemsize
    )

    def build(semantics, vmem_limit):
        return pl.pallas_call(
            _spike_kernel,
            out_shape=jax.ShapeDtypeStruct((rows, lanes), dtype),
            grid_spec=pltpu.PrefetchScalarGridSpec(
                num_scalar_prefetch=0,
                grid=(num_blocks,),
                in_specs=[
                    pl.BlockSpec(memory_space=pltpu.MemorySpace.SMEM),  # threshold
                    pl.BlockSpec((block_rows, lanes), lambda i: (i, 0)),
                ],
                out_specs=pl.BlockSpec((block_rows, lanes), lambda i: (i, 0)),
            ),
            compiler_params=pltpu.CompilerParams(
                dimension_semantics=semantics,
                vmem_limit_bytes=vmem_limit,
            ),
            cost_estimate=cost,
            input_output_aliases=({1: 0} if donate else {}),
        )

    candidates = []
    if is_v7x and num_blocks >= 2:
        # Pure HBM streaming: each TC drives its own DMA queues, so sharding
        # the block loop across both v7x TensorCores is ~2x on large tensors.
        candidates.append(((pltpu.CORE_PARALLEL,), 48 * _MIB))
    candidates.append((("parallel",), 48 * _MIB if is_v7x else None))

    err = None
    for semantics, vmem_limit in candidates:
        try:
            return build(semantics, vmem_limit)(thr_arr, x2d)
        except Exception as e:   # fall back if a semantics variant fails to lower
            err = e
    raise err


def discontinuous_neuron(x, threshold, *, donate_input=False):
    """Pallas equivalent of _DiscontinuousNeuron(heaviside, threshold)(x).

    donate_input=True aliases the output HBM buffer onto the kernel's input
    (useful when the caller donates x, e.g. under jit(donate_argnums=...)).
    """
    orig_shape = x.shape
    dtype = x.dtype
    n = x.size
    if n == 0:
        return x

    x_flat = jnp.reshape(x, (-1,))
    rows = n // _LANES
    rem = n - rows * _LANES

    thr_arr = jnp.asarray([threshold], dtype=jnp.float32)

    parts = []
    if rows > 0:
        main = x_flat if rem == 0 else x_flat[: rows * _LANES]
        x2d = jnp.reshape(main, (rows, _LANES))
        out2d = _spike_pallas(x2d, thr_arr, donate_input)
        parts.append(jnp.reshape(out2d, (-1,)))
    if rem != 0:
        # Ragged (<128 element) tail handled in plain jnp: no full padded copy
        # of the whole tensor just for a few trailing elements.
        tail = x_flat[rows * _LANES:]
        parts.append(
            ((tail.astype(jnp.float32) - jnp.float32(threshold)) > 0).astype(dtype)
        )
    out_flat = parts[0] if len(parts) == 1 else jnp.concatenate(parts)
    return jnp.reshape(out_flat, orig_shape)


def _reference(x, threshold):
    # Same semantics as the kernel: compare in f32, strict ">".
    return ((x.astype(jnp.float32) - jnp.float32(threshold)) > 0).astype(x.dtype)


if __name__ == "__main__":
    key = jax.random.PRNGKey(0)
    threshold = 0.5   # scalar hyperparameter; module has no learned parameters

    # NCHW input consistent with typical SNN conv/linear feature maps.
    x = jax.random.normal(key, (2, 4, 16, 16), dtype=jnp.float32)
    out = jax.block_until_ready(discontinuous_neuron(x, threshold))
    assert out.shape == x.shape and out.dtype == x.dtype
    assert bool(jnp.all(out == _reference(x, threshold)))

    # Larger multi-block shape (fat-block path).
    k1, k2, k3 = jax.random.split(key, 3)
    x_big = jax.random.normal(k1, (8, 64, 64, 128), dtype=jnp.float32)
    out_big = jax.block_until_ready(discontinuous_neuron(x_big, threshold))
    assert bool(jnp.all(out_big == _reference(x_big, threshold)))

    # bf16 input exercises the dtype-aware block sizing + f32 compare.
    x_bf16 = jax.random.normal(k2, (4, 8, 32, 32), dtype=jnp.bfloat16)
    out_bf16 = jax.block_until_ready(discontinuous_neuron(x_bf16, threshold))
    assert out_bf16.dtype == jnp.bfloat16
    assert bool(jnp.all(out_bf16 == _reference(x_bf16, threshold)))

    # Ragged numel (not a multiple of 128) exercises the prefix + jnp-tail path.
    x_rag = jax.random.normal(k3, (5, 7, 11), dtype=jnp.float32)
    out_rag = jax.block_until_ready(discontinuous_neuron(x_rag, threshold))
    assert bool(jnp.all(out_rag == _reference(x_rag, threshold)))

    print("KERNEL_OK")
</pallas_src>

<mosaic_0001>
module attributes {stable_mosaic.version = 11 : i64} {
  func.func @_spike_kernel(%arg0: i32, %arg1: memref<1xf32, #tpu.memory_space<smem>>, %arg2: memref<16x128xf32, #tpu.memory_space<vmem>>, %arg3: memref<16x128xf32, #tpu.memory_space<vmem>>) attributes {dimension_semantics = [#tpu.dimension_semantics<parallel>], iteration_bounds = array<i64: 1>, scalar_prefetch = 0 : i64, scratch_operands = 0 : i64, tpu.core_type = #tpu.core_type<tc>, window_params = [{transform_indices = @transform_0, window_bounds = array<i64: 1>}, {transform_indices = @transform_1, window_bounds = array<i64: 16, 128>}, {transform_indices = @transform_2, window_bounds = array<i64: 16, 128>}]} {
    %c0 = arith.constant 0 : index
    %0 = memref.load %arg1[%c0] : memref<1xf32, #tpu.memory_space<smem>>
    %c0_0 = arith.constant 0 : index
    %c0_1 = arith.constant 0 : index
    %1 = vector.load %arg2[%c0_0, %c0_1] : memref<16x128xf32, #tpu.memory_space<vmem>>, vector<16x128xf32>
    %2 = vector.broadcast %0 : f32 to vector<16x128xf32>
    %3 = arith.subf %1, %2 : vector<16x128xf32>
    %cst = arith.constant 0.000000e+00 : f32
    %4 = vector.broadcast %cst : f32 to vector<16x128xf32>
    %5 = arith.cmpf ogt, %3, %4 : vector<16x128xf32>
    %6 = arith.extui %5 : vector<16x128xi1> to vector<16x128xi32>
    %7 = arith.sitofp %6 : vector<16x128xi32> to vector<16x128xf32>
    %c0_2 = arith.constant 0 : index
    %c0_3 = arith.constant 0 : index
    %8 = vector.load %arg3[%c0_2, %c0_3] : memref<16x128xf32, #tpu.memory_space<vmem>>, vector<16x128xf32>
    tpu.vector_store %arg3[%c0_2, %c0_3], %7 {strides = array<i32>} : memref<16x128xf32, #tpu.memory_space<vmem>>, vector<16x128xf32>,
    return
  }
  func.func @transform_0(%arg0: i32) -> i32 {
    %c0_i32 = arith.constant 0 : i32
    %c0_i32_0 = arith.constant 0 : i32
    return %c0_i32 : i32
  }
  func.func @transform_1(%arg0: i32) -> (i32, i32) {
    %c0_i32 = arith.constant 0 : i32
    %c0_i32_0 = arith.constant 0 : i32
    return %arg0, %c0_i32 : i32, i32
  }
  func.func @transform_2(%arg0: i32) -> (i32, i32) {
    %c0_i32 = arith.constant 0 : i32
    %c0_i32_0 = arith.constant 0 : i32
    return %arg0, %c0_i32 : i32, i32
  }
}

</mosaic_0001>

<llo_original>
// kernel: tpu_custom_call.1
$region0: #{tpu_custom_call.1}
  #allocation0 [shape = 'u32[]', space=smem, size = 0x4, offset = 0x4, fixed_abs, tag = 'smem constant byte address 0x4 - core index']
  #allocation1 [shape = 'u32[72,128]{1,0:T(1,128)}', space=vmem, size = 0x9000, scoped, tag = 'internal scratch']
  #allocation2 [shape = 'f32[1]{0:T(128)S(6)}', space=smem, size = 0x200, scoped, tag = 'scoped memory for tpu_custom_call.1']
  %s0 = inlined_call_operand.<no memory space> [shape: f32[1], index: 0, kind: input, shape index: {}]
  %s1 = inlined_call_operand.hbm [shape: f32[16,128], index: 1, kind: input, shape index: {}]
  %s2 = inlined_call_operand.hbm [shape: f32[16,128], index: 2, kind: output, shape index: {}]
  %s3 = sld [smem:[#allocation0]]
  $region22: #{tpu_custom_call.1} parent=0
    _
  %s5 = ssub.s32 1, %s3
  %s6 = scalar_select 0, %s5, %s3
  %7 = sst [smem:[#allocation2]] %s0
  $region1: #{tpu_custom_call.1} parent=0
    #allocation3 [shape = 'u8[8192]{0}', space=vmem, size = 0x2000, scoped, tag = 'input window, operand 1, single buffered']
    #allocation4 [shape = 's32[1]{0}', space=sflag, size = 0x4, scoped, tag = 'scoped memory for tpu_custom_call.1']
    #allocation5 [shape = 's32[1]{0}', space=sflag, size = 0x4, scoped, tag = 'scoped memory for tpu_custom_call.1']
    #allocation6 [shape = 'u8[8192]{0}', space=vmem, size = 0x2000, scoped, tag = 'output window, operand 0, single buffered']
    %8 = vsyncpa [#allocation4], 0
    %9 = vsyncpa [#allocation5], 0
    // Predicated region
    $region2: #{tpu_custom_call.1} parent=1 // pred_check
      _
    $region3: #{tpu_custom_call.1} parent=1 // pred_check_branch
      %11 = sbr.rel (0) target = $region5
    $region4: #{tpu_custom_call.1} parent=1 // pred_region
      _
    $region5: #{tpu_custom_call.1} parent=1 // pred_fallthru
      _
    // Predicated region
    $region6: #{tpu_custom_call.1} parent=1 // pred_check
      _
    $region7: #{tpu_custom_call.1} parent=1 // pred_check_branch
      %13 = sbr.rel (0) target = $region9
    $region8: #{tpu_custom_call.1} parent=1 // pred_region
      %15 = vsyncadd [#allocation4], 0
      %s16 = sshll.u32 %s1, 4
      %s17 = int_to_ptr.hbm [resolvable:$true] %s16
      %s18 = sshll.u32 [#allocation3], 4
      %s19 = int_to_ptr.vmem [resolvable:$true] %s18
      %24 = dma.hbm_to_vmem [thread:$0]  %s17, 256, %s19, [#allocation4], 128, 128, 8
    $region9: #{tpu_custom_call.1} parent=1 // pred_fallthru
      _
    // Predicated region
    $region10: #{tpu_custom_call.1} parent=1 // pred_check
      _
    $region11: #{tpu_custom_call.1} parent=1 // pred_check_branch
      %26 = sbr.rel (0) target = $region13
    $region12: #{tpu_custom_call.1} parent=1 // pred_region
      %28 = dma.done [#allocation4], 256
    $region13: #{tpu_custom_call.1} parent=1 // pred_fallthru
      _
    %s29 = sld [smem:[#allocation2]]
    %v30 = vld [vmem:[#allocation3] sm:$0xff]
    %v31 = vld [vmem:[#allocation3 + $0x8] sm:$0xff]
    %v32 = vstv %s29
    %v33 = vsub.f32 %v30, %v32
    %v34 = vsub.f32 %v31, %v32
    %vm35 = vcmp.gt.f32.partialorder %v33, 0.0
    %vm36 = vcmp.gt.f32.partialorder %v34, 0.0
    %v37 = vsel %vm35, 1, 0
    %v38 = vsel %vm36, 1, 0
    %v39 = vcvt.s32.f32 %v37
    %v40 = vcvt.s32.f32 %v38
    %41 = vst [vmem:[#allocation6] sm:$0xff] %v39
    %42 = vst [vmem:[#allocation6 + $0x8] sm:$0xff] %v40
    // Predicated region
    $region14: #{tpu_custom_call.1} parent=1 // pred_check
      _
    $region15: #{tpu_custom_call.1} parent=1 // pred_check_branch
      %44 = sbr.rel (0) target = $region17
    $region16: #{tpu_custom_call.1} parent=1 // pred_region
      %46 = vsyncadd [#allocation5], 0
      %s47 = sshll.u32 [#allocation6], 4
      %s48 = int_to_ptr.vmem [resolvable:$true] %s47
      %s49 = sshll.u32 %s2, 4
      %s50 = int_to_ptr.hbm [resolvable:$true] %s49
      %55 = dma.vmem_to_hbm [thread:$0]  %s48, 256, %s50, [#allocation5], 128, 128, 8
    $region17: #{tpu_custom_call.1} parent=1 // pred_fallthru
      _
    // Predicated region
    $region18: #{tpu_custom_call.1} parent=1 // pred_check
      _
    $region19: #{tpu_custom_call.1} parent=1 // pred_check_branch
      %57 = sbr.rel (0) target = $region21
    $region20: #{tpu_custom_call.1} parent=1 // pred_region
      %59 = dma.done [#allocation5], 256
    $region21: #{tpu_custom_call.1} parent=1 // pred_fallthru
      _
    %60 = vsyncpa [#allocation4], 1
    %61 = vsyncpa [#allocation5], 1

</llo_original>
